<compile_context>
chip_gen: v5e
topology: v5e:2x2
jax: 0.10.0
libtpu: 0.0.40
codegen_flags: <defaults>
</compile_context>

<pallas_src>
import math

import jax
import jax.numpy as jnp
import numpy as np
from jax.experimental import pallas as pl
from jax.experimental.pallas import tpu as pltpu


def _round_up(x, m):
    return ((x + m - 1) // m) * m


def _ceil_div(a, b):
    return -(-a // b)


# ---------------------------------------------------------------------------
# Cell-anchor construction (pure host-side glue, deterministic, no params).
# ---------------------------------------------------------------------------
def _broadcast_params(params, num_features, name):
    assert isinstance(params, (list, tuple)), f"{name} must be a list"
    assert len(params), f"{name} cannot be empty"
    if not isinstance(params[0], (list, tuple)):
        return [list(params)] * num_features
    if len(params) == 1:
        return [list(params[0])] * num_features
    assert len(params) == num_features, (
        f"Got {name} of length {len(params)}, expected {num_features}")
    return [list(p) for p in params]


def generate_cell_anchors(sizes, aspect_ratios):
    anchors = []
    for size in sizes:
        area = size ** 2.0
        for ar in aspect_ratios:
            w = math.sqrt(area / ar)
            h = ar * w
            anchors.append([-w / 2.0, -h / 2.0, w / 2.0, h / 2.0])
    return np.asarray(anchors, dtype=np.float32)  # (A, 4)


def _hbm_write_bw_bytes_per_s():
    """Per-generation HBM write bandwidth estimate for the tile-height cost model."""
    try:
        kind = jax.devices()[0].device_kind.lower()
    except Exception:
        kind = ""
    if "v7" in kind:
        return 3.2e12
    if "v6" in kind:
        return 1.4e12
    if "v5" in kind:
        return 0.82e12
    return 1.0e12


# ---------------------------------------------------------------------------
# Pallas kernel: single fused call over all feature levels.
#   scalar prefetch (SMEM): lvl (level id), y0 (ystart*fold*stride), rsc (fold*stride)
#   resident VMEM inputs:   base (num_levels, 1, Lp), ymask (num_levels, 1, Lp)
#   output block:           (th, Lp)
# ---------------------------------------------------------------------------
def _anchor_kernel(lvl_ref, y0_ref, rsc_ref, base_ref, ymask_ref, out_ref):
    t = pl.program_id(0)
    lvl = lvl_ref[t]
    th = out_ref.shape[0]

    # (th, 1) sublane-only row index; all column-dependent terms are hoisted into
    # base_ref / ymask_ref, so the body is one broadcast FMA -> store.
    row = jax.lax.broadcasted_iota(jnp.int32, (th, 1), 0)
    shift_y = (row * rsc_ref[t] + y0_ref[t]).astype(jnp.float32)

    out_ref[...] = base_ref[lvl] + ymask_ref[lvl] * shift_y


# ---------------------------------------------------------------------------
# AnchorGenerator wrapper (JAX / Pallas).
# ---------------------------------------------------------------------------
class AnchorGeneratorPallas:
    box_dim = 4

    _MAX_OUT_BLOCK_BYTES = 8 * 1024 * 1024     # cap on a single output block
    _STEP_OVERHEAD_S = 0.35e-6                 # per-grid-step overhead

    def __init__(self, sizes, aspect_ratios, strides, offset=0.5):
        self.strides = [int(s) for s in strides]
        self.num_features = len(self.strides)
        sizes = _broadcast_params(sizes, self.num_features, "sizes")
        aspect_ratios = _broadcast_params(aspect_ratios, self.num_features, "aspect_ratios")
        self._cell_anchors_np = [generate_cell_anchors(s, a)
                                 for s, a in zip(sizes, aspect_ratios)]
        self.cell_anchors = [jnp.asarray(ca) for ca in self._cell_anchors_np]
        self.offset = float(offset)
        assert 0.0 <= self.offset < 1.0, self.offset
        self._plans = {}   # cache keyed by the tuple of grid sizes

    @property
    def num_anchors(self):
        return [int(ca.shape[0]) for ca in self._cell_anchors_np]

    num_cell_anchors = num_anchors

    # -- fused kernel plan (constants + pallas_call), built once per grid-size tuple --
    def _build_plan(self, grid_sizes):
        num_levels = len(grid_sizes)
        assert num_levels == self.num_features
        Hs = [h for h, _ in grid_sizes]
        Ws = [w for _, w in grid_sizes]
        As = [int(ca.shape[0]) for ca in self._cell_anchors_np]
        Ls = [w * a * 4 for w, a in zip(Ws, As)]     # lane width of one grid-y row

        # Shared lane width: widest (unfolded) level, multiple of 128 (unmasked vst).
        Lp = max(128, _round_up(max(Ls), 128))

        # y-row folding: narrow levels pack `fold` grid-y rows per slab row so every
        # level is (near-)lane-dense at Lp.
        folds = [max(1, min(Lp // L, max(1, H))) for L, H in zip(Ls, Hs)]
        rows = [_ceil_div(H, f) for H, f in zip(Hs, folds)]   # slab rows per level

        # -- cost-model search for the tile height th (multiples of 8) --
        bw = _hbm_write_bw_bytes_per_s()
        th_cap = max(8, min(1024, ((self._MAX_OUT_BLOCK_BYTES // (Lp * 4)) // 8) * 8))
        best_th, best_cost = 8, None
        for th_c in range(8, th_cap + 1, 8):
            padded_rows = sum(_round_up(r, th_c) for r in rows)
            steps = sum(_round_up(r, th_c) // th_c for r in rows)
            cost = padded_rows * Lp * 4 / bw + steps * self._STEP_OVERHEAD_S
            if best_cost is None or cost < best_cost:
                best_cost, best_th = cost, th_c
        th = best_th
        # Only force a split when the whole pyramid would otherwise be a single tile
        # (keeps v7x 2-TC sharding possible without inflating padded rows).
        total_tiles = sum(_round_up(r, th) // th for r in rows)
        if total_tiles < 2 and th > 8:
            th = max(8, _round_up(_ceil_div(max(rows), 2), 8))

        # -- hoisted per-level constant rows (all column-invariant terms) --
        base_sx = np.zeros((num_levels, 1, Lp), np.float32)
        ymask = np.zeros((num_levels, 1, Lp), np.float32)
        for l in range(num_levels):
            A, W, L, f = As[l], Ws[l], Ls[l], folds[l]
            Lf = f * L
            ca = self._cell_anchors_np[l]
            j = np.arange(Lf)
            sub = j // L               # which folded grid-y sub-row within a slab row
            jj = j % L
            c = jj % 4
            a = (jj // 4) % A
            w = jj // (4 * A)
            is_y = (c == 1) | (c == 3)
            shift_x = (w.astype(np.float64) + self.offset) * float(self.strides[l])
            y_base = (sub.astype(np.float64) + self.offset) * float(self.strides[l])
            base_sx[l, 0, :Lf] = (ca[a, c].astype(np.float64)
                                  + np.where(is_y, y_base, shift_x)).astype(np.float32)
            ymask[l, 0, :Lf] = is_y.astype(np.float32)

        # -- per-tile scalars + output-slab layout (levels stacked along rows) --
        lvl_list, y0_list, rsc_list, slices = [], [], [], []
        r0 = 0
        for l in range(num_levels):
            n_tiles = _round_up(rows[l], th) // th
            slices.append((r0, rows[l], folds[l], Hs[l], Ws[l], As[l], Ls[l]))
            for k in range(n_tiles):
                lvl_list.append(l)
                y0_list.append(k * th * folds[l] * self.strides[l])
                rsc_list.append(folds[l] * self.strides[l])
            r0 += n_tiles * th
        total_rows = r0
        num_tiles = len(lvl_list)

        # -- VMEM limit from actual usage (double-buffered output + resident tables) --
        out_block = th * Lp * 4
        # each (1, Lp) table row pads to 8 sublanes; 2 tables, allow 2 buffers each.
        table_bytes = 2 * 2 * num_levels * 8 * Lp * 4
        vmem_limit = int(min(48 << 20,
                             max(8 << 20, 3 * out_block + table_bytes + (2 << 20))))

        call = pl.pallas_call(
            _anchor_kernel,
            out_shape=jax.ShapeDtypeStruct((total_rows, Lp), jnp.float32),
            grid_spec=pltpu.PrefetchScalarGridSpec(
                num_scalar_prefetch=3,
                grid=(num_tiles,),
                in_specs=[
                    # Resident constant tables: full-array blocks, fetched once.
                    pl.BlockSpec((num_levels, 1, Lp),
                                 lambda t, lvl_r, y0_r, rs_r: (0, 0, 0)),
                    pl.BlockSpec((num_levels, 1, Lp),
                                 lambda t, lvl_r, y0_r, rs_r: (0, 0, 0)),
                ],
                out_specs=pl.BlockSpec((th, Lp),
                                       lambda t, lvl_r, y0_r, rs_r: (t, 0)),
            ),
            compiler_params=pltpu.CompilerParams(
                dimension_semantics=("parallel",),
                vmem_limit_bytes=vmem_limit,
            ),
        )
        return dict(
            call=call,
            lvl=jnp.asarray(lvl_list, jnp.int32),
            y0=jnp.asarray(y0_list, jnp.int32),
            rsc=jnp.asarray(rsc_list, jnp.int32),
            base_sx=jnp.asarray(base_sx),
            ymask=jnp.asarray(ymask),
            slices=slices,
        )

    def __call__(self, grid_sizes):
        key = tuple((int(h), int(w)) for h, w in grid_sizes)
        plan = self._plans.get(key)
        if plan is None:
            plan = self._build_plan(key)
            self._plans[key] = plan

        slab = plan["call"](plan["lvl"], plan["y0"], plan["rsc"],
                            plan["base_sx"], plan["ymask"])

        anchors = []
        for (r0, nrows, f, H, W, A, L) in plan["slices"]:
            lvl_rows = slab[r0:r0 + nrows, :f * L].reshape(nrows * f, L)
            anchors.append(lvl_rows[:H].reshape(H * W * A, 4))
        return anchors


# ---------------------------------------------------------------------------
# Pure NumPy reference (mirrors the PyTorch semantics) for verification.
# ---------------------------------------------------------------------------
def reference_grid_anchors(cell_anchors, grid_size, stride, offset):
    H, W = grid_size
    shifts_x = np.arange(offset * stride, W * stride, step=stride, dtype=np.float32)
    shifts_y = np.arange(offset * stride, H * stride, step=stride, dtype=np.float32)
    shift_y, shift_x = np.meshgrid(shifts_y, shifts_x, indexing="ij")
    shift_x = shift_x.reshape(-1)
    shift_y = shift_y.reshape(-1)
    shifts = np.stack((shift_x, shift_y, shift_x, shift_y), axis=1)
    return (shifts.reshape(-1, 1, 4) + cell_anchors.reshape(1, -1, 4)).reshape(-1, 4)


if __name__ == "__main__":
    # Small deterministic configuration (three feature levels). The last levels
    # exercise y-row folding (fold=2 and fold=3), row padding (H=7), and residual
    # lane padding (fold*L = 360 < Lp = 384).
    sizes = [[32.0, 64.0]]                 # broadcast over all levels
    aspect_ratios = [[0.5, 1.0, 2.0]]      # -> A = 2 * 3 = 6 cell anchors per level
    strides = [8, 16, 32]
    offset = 0.5
    grid_sizes = [[16, 16], [8, 8], [7, 5]]   # (H, W) per feature level

    # jax.random.PRNGKey(0) kept for reproducibility convention (module has no
    # random parameters; anchors are fully determined by the config).
    _ = jax.random.PRNGKey(0)

    gen = AnchorGeneratorPallas(sizes, aspect_ratios, strides, offset=offset)
    outs = gen(grid_sizes)
    outs = [jax.block_until_ready(o) for o in outs]

    # Verify against the reference semantics.
    for o, gs, st, ca in zip(outs, grid_sizes, strides, gen._cell_anchors_np):
        ref = reference_grid_anchors(ca, gs, st, offset)
        assert o.shape == ref.shape, (o.shape, ref.shape)
        assert o.dtype == jnp.float32
        np.testing.assert_allclose(np.asarray(o), ref, rtol=1e-6, atol=1e-5)

    print("KERNEL_OK")
</pallas_src>

<mosaic_0001>
module attributes {stable_mosaic.version = 11 : i64} {
  func.func @_anchor_kernel(%arg0: i32, %arg1: memref<3xi32, #tpu.memory_space<smem>>, %arg2: memref<3xi32, #tpu.memory_space<smem>>, %arg3: memref<3xi32, #tpu.memory_space<smem>>, %arg4: memref<3x1x384xf32, #tpu.memory_space<vmem>>, %arg5: memref<3x1x384xf32, #tpu.memory_space<vmem>>, %arg6: memref<16x384xf32, #tpu.memory_space<vmem>>) attributes {dimension_semantics = [#tpu.dimension_semantics<parallel>], iteration_bounds = array<i64: 3>, scalar_prefetch = 3 : i64, scratch_operands = 0 : i64, tpu.core_type = #tpu.core_type<tc>, window_params = [{pipeline_mode = #tpu.pipeline_mode<synchronous>, transform_indices = @transform_0, window_bounds = array<i64: 3, 1, 384>}, {pipeline_mode = #tpu.pipeline_mode<synchronous>, transform_indices = @transform_1, window_bounds = array<i64: 3, 1, 384>}, {transform_indices = @transform_2, window_bounds = array<i64: 16, 384>}]} {
    %0 = arith.index_cast %arg0 : i32 to index
    %1 = memref.load %arg1[%0] : memref<3xi32, #tpu.memory_space<smem>>
    %2 = tpu.iota {dimensions = array<i32: 0>} : vector<16x1xi32>
    %3 = arith.index_cast %arg0 : i32 to index
    %4 = memref.load %arg3[%3] : memref<3xi32, #tpu.memory_space<smem>>
    %5 = vector.broadcast %4 : i32 to vector<16x1xi32>
    %6 = arith.muli %2, %5 : vector<16x1xi32>
    %7 = arith.index_cast %arg0 : i32 to index
    %8 = memref.load %arg2[%7] : memref<3xi32, #tpu.memory_space<smem>>
    %9 = vector.broadcast %8 : i32 to vector<16x1xi32>
    %10 = arith.addi %6, %9 : vector<16x1xi32>
    %11 = arith.sitofp %10 : vector<16x1xi32> to vector<16x1xf32>
    %12 = arith.index_cast %1 : i32 to index
    %c0 = arith.constant 0 : index
    %c0_0 = arith.constant 0 : index
    %13 = vector.load %arg4[%12, %c0, %c0_0] : memref<3x1x384xf32, #tpu.memory_space<vmem>>, vector<1x1x384xf32>
    %14 = vector.shape_cast %13 : vector<1x1x384xf32> to vector<1x384xf32>
    %15 = arith.index_cast %1 : i32 to index
    %c0_1 = arith.constant 0 : index
    %c0_2 = arith.constant 0 : index
    %16 = vector.load %arg5[%15, %c0_1, %c0_2] : memref<3x1x384xf32, #tpu.memory_space<vmem>>, vector<1x1x384xf32>
    %17 = vector.shape_cast %16 : vector<1x1x384xf32> to vector<1x384xf32>
    %18 = vector.broadcast %17 : vector<1x384xf32> to vector<16x384xf32>
    %19 = vector.broadcast %11 : vector<16x1xf32> to vector<16x384xf32>
    %20 = arith.mulf %18, %19 : vector<16x384xf32>
    %21 = vector.broadcast %14 : vector<1x384xf32> to vector<16x384xf32>
    %22 = arith.addf %21, %20 : vector<16x384xf32>
    %c0_3 = arith.constant 0 : index
    %c0_4 = arith.constant 0 : index
    %23 = vector.load %arg6[%c0_3, %c0_4] : memref<16x384xf32, #tpu.memory_space<vmem>>, vector<16x384xf32>
    tpu.vector_store %arg6[%c0_3, %c0_4], %22 {strides = array<i32>} : memref<16x384xf32, #tpu.memory_space<vmem>>, vector<16x384xf32>,
    return
  }
  func.func @transform_0(%arg0: i32, %arg1: memref<3xi32, #tpu.memory_space<smem>>, %arg2: memref<3xi32, #tpu.memory_space<smem>>, %arg3: memref<3xi32, #tpu.memory_space<smem>>) -> (i32, i32, i32) {
    %c0_i32 = arith.constant 0 : i32
    %c0_i32_0 = arith.constant 0 : i32
    %c0_i32_1 = arith.constant 0 : i32
    %c0_i32_2 = arith.constant 0 : i32
    return %c0_i32, %c0_i32_0, %c0_i32_1 : i32, i32, i32
  }
  func.func @transform_1(%arg0: i32, %arg1: memref<3xi32, #tpu.memory_space<smem>>, %arg2: memref<3xi32, #tpu.memory_space<smem>>, %arg3: memref<3xi32, #tpu.memory_space<smem>>) -> (i32, i32, i32) {
    %c0_i32 = arith.constant 0 : i32
    %c0_i32_0 = arith.constant 0 : i32
    %c0_i32_1 = arith.constant 0 : i32
    %c0_i32_2 = arith.constant 0 : i32
    return %c0_i32, %c0_i32_0, %c0_i32_1 : i32, i32, i32
  }
  func.func @transform_2(%arg0: i32, %arg1: memref<3xi32, #tpu.memory_space<smem>>, %arg2: memref<3xi32, #tpu.memory_space<smem>>, %arg3: memref<3xi32, #tpu.memory_space<smem>>) -> (i32, i32) {
    %c0_i32 = arith.constant 0 : i32
    %c0_i32_0 = arith.constant 0 : i32
    return %arg0, %c0_i32 : i32, i32
  }
}

</mosaic_0001>

<llo_original>
// kernel: tpu_custom_call.1
$region0: #{tpu_custom_call.1}
  #allocation0 [shape = 'u32[]', space=smem, size = 0x4, offset = 0x4, fixed_abs, tag = 'smem constant byte address 0x4 - core index']
  #allocation1 [shape = 'u32[72,128]{1,0:T(1,128)}', space=vmem, size = 0x9000, scoped, tag = 'internal scratch']
  #allocation2 [shape = 's32[1]{0}', space=sflag, size = 0x4, scoped, tag = 'scoped memory for tpu_custom_call.1']
  #allocation3 [shape = 'u8[512]{0}', space=smem, size = 0x200, scoped, tag = 'prefetched SMEM operand 0']
  #allocation4 [shape = 'u8[512]{0}', space=smem, size = 0x200, scoped, tag = 'prefetched SMEM operand 1']
  #allocation5 [shape = 'u8[512]{0}', space=smem, size = 0x200, scoped, tag = 'prefetched SMEM operand 2']
  %s0 = inlined_call_operand.hbm [shape: s32[3], index: 0, kind: input, shape index: {}]
  %s1 = inlined_call_operand.hbm [shape: s32[3], index: 1, kind: input, shape index: {}]
  %s2 = inlined_call_operand.vmem [shape: s32[3], index: 2, kind: input, shape index: {}]
  %s3 = inlined_call_operand.hbm [shape: f32[3,1,384], index: 3, kind: input, shape index: {}]
  %s4 = inlined_call_operand.hbm [shape: f32[3,1,384], index: 4, kind: input, shape index: {}]
  %s5 = inlined_call_operand.hbm [shape: f32[48,384], index: 5, kind: output, shape index: {}]
  %s6 = sld [smem:[#allocation0]]
  $region49: #{tpu_custom_call.1} parent=0
    _
  %s8 = ssub.s32 1, %s6
  %s9 = scalar_select 0, %s8, %s6
  %s11 = sshll.u32 %s0, 4
  %s12 = int_to_ptr.hbm [resolvable:$true] %s11
  %14 = dma.hbm_to_smem %s12, 16, [#allocation3], [#allocation2]
  %s16 = sshll.u32 %s1, 4
  %s17 = int_to_ptr.hbm [resolvable:$true] %s16
  %19 = dma.hbm_to_smem %s17, 16, [#allocation4], [#allocation2]
  %s21 = sshll.u32 %s2, 4
  %s22 = int_to_ptr.vmem [resolvable:$true] %s21
  %24 = dma.vmem_to_smem %s22, 16, [#allocation5], [#allocation2]
  %26 = dma.done [#allocation2], 48
  %27 = sfence
  $region1: #{tpu_custom_call.1} parent=0
    #allocation6 [shape = 'u8[4608]{0}', space=vmem, size = 0x1400, scoped, tag = 'input window, operand 3, single buffered']
    #allocation7 [shape = 's32[2]{0}', space=sflag, size = 0x8, scoped, tag = 'scoped memory for tpu_custom_call.1']
    #allocation8 [shape = 's32[2]{0}', space=sflag, size = 0x8, scoped, tag = 'scoped memory for tpu_custom_call.1']
    #allocation9 [shape = 'u8[4608]{0}', space=vmem, size = 0x1400, scoped, tag = 'input window, operand 4, single buffered']
    #allocation10 [shape = 's32[1]{0}', space=sflag, size = 0x4, scoped, tag = 'scoped memory for tpu_custom_call.1']
    #allocation11 [shape = 'u8[49152]{0}', space=vmem, size = 0xc000, scoped, tag = 'output window, operand 0']
    %28 = vsyncpa [#allocation7], 0
    %29 = vsyncpa [#allocation10], 0
    %30 = vsyncpa [#allocation8], 0
    %s31 = scalar_lea.sflag [#allocation8], 1
    %32 = vsyncpa %s31, 0
    loop: start=0, step=1, limit=5
    $region2: #{tpu_custom_call.1} parent=1 // loop_pre_header
      _
    $region3: #{tpu_custom_call.1} parent=1 // loop_header
      %s34 = sphi 0, %s38
      %p35 = scmp.ge.s32.totalorder %s34, 5
      %s42 = sphi 0, %s42
      %s44 = sphi 0, %s42
      %s45 = sphi 0, %s44
      %s59 = sphi 0, %s45
      %s63 = sphi 0, %s63
      %s65 = sphi 0, %s63
      %s66 = sphi 0, %s65
      %s80 = sphi 0, %s66
      %s86 = sphi 0, %s88
      %s89 = sphi 0, %s86
      %s90 = sphi 0, %s89
      %s106 = sphi 0, %s90
    $region4: #{tpu_custom_call.1} parent=1 // loop_header_branch
      %37 = sbr.rel (%p35) target = $region8
    $region5: #{tpu_custom_call.1} parent=1 // loop_body
      %s39 = ssub.s32 %s34, 1
      %s40 = ssub.s32 %s34, 2
      %s41 = sadd.s32 %s34, 1
      %s43 = sadd.s32 %s42, 1
      %p46 = scmp.eq.s32.totalorder %s34, 2
      %p47 = scmp.ne.s32.totalorder %s42, %s44
      %p48 = scmp.eq.s32.totalorder %s34, 0
      %p49 = por %p47, %p48
      %p50 = scmp.ne.s32.totalorder %s42, %s44
      %p51 = scmp.eq.s32.totalorder %s39, 2
      %p52 = por %p50, %p51
      %p53 = scmp.ne.s32.totalorder %s44, %s45
      %p54 = scmp.eq.s32.totalorder %s39, 0
      %p55 = por %p53, %p54
      %p56 = scmp.ne.s32.totalorder %s44, %s45
      %p57 = scmp.eq.s32.totalorder %s40, 2
      %p58 = por %p56, %p57
      %p60 = scmp.ne.s32.totalorder %s45, %s59
      %p61 = scmp.eq.s32.totalorder %s40, 0
      %p62 = por %p60, %p61
      %s64 = sadd.s32 %s63, 1
      %p67 = scmp.eq.s32.totalorder %s34, 2
      %p68 = scmp.ne.s32.totalorder %s63, %s65
      %p69 = scmp.eq.s32.totalorder %s34, 0
      %p70 = por %p68, %p69
      %p71 = scmp.ne.s32.totalorder %s63, %s65
      %p72 = scmp.eq.s32.totalorder %s39, 2
      %p73 = por %p71, %p72
      %p74 = scmp.ne.s32.totalorder %s65, %s66
      %p75 = scmp.eq.s32.totalorder %s39, 0
      %p76 = por %p74, %p75
      %p77 = scmp.ne.s32.totalorder %s65, %s66
      %p78 = scmp.eq.s32.totalorder %s40, 2
      %p79 = por %p77, %p78
      %p81 = scmp.ne.s32.totalorder %s66, %s80
      %p82 = scmp.eq.s32.totalorder %s40, 0
      %p83 = por %p81, %p82
      %s84 = ssub.s32 %s34, %s41
      %p85 = scmp.eq.s32.totalorder %s84, 0
      %s87 = sadd.s32 %s86, 1
      %s88 = scalar_select %p85, %s86, %s87
      %p91 = pneg %p85
      %p92 = scmp.eq.s32.totalorder %s34, 2
      %p93 = por %p91, %p92
      %p94 = scmp.ne.s32.totalorder %s86, %s89
      %p95 = scmp.eq.s32.totalorder %s34, 0
      %p96 = por %p94, %p95
      %p97 = scmp.ne.s32.totalorder %s86, %s89
      %p98 = scmp.eq.s32.totalorder %s39, 2
      %p99 = por %p97, %p98
      %p100 = scmp.ne.s32.totalorder %s89, %s90
      %p101 = scmp.eq.s32.totalorder %s39, 0
      %p102 = por %p100, %p101
      %p103 = scmp.ne.s32.totalorder %s89, %s90
      %p104 = scmp.eq.s32.totalorder %s40, 2
      %p105 = por %p103, %p104
      %p107 = scmp.ne.s32.totalorder %s90, %s106
      %p108 = scmp.eq.s32.totalorder %s40, 0
      %p109 = por %p107, %p108
      %p110 = scmp.le.s32.totalorder 1, %s34
      %p111 = scmp.lt.s32.totalorder %s34, 4
      %p112 = pnand %p110, %p111
      %p113 = pneg %p112
      // Predicated region
      $region9: #{tpu_custom_call.1} parent=5 // pred_check
        _
      $region10: #{tpu_custom_call.1} parent=5 // pred_check_branch
        %115 = sbr.rel (%p112) target = $region12
      $region11: #{tpu_custom_call.1} parent=5 // pred_region
        %s116 = ssub.s32 %s34, 1
        // Predicated region
        $region13: #{tpu_custom_call.1} parent=11 // pred_check
          %p117 = pneg %p55
        $region14: #{tpu_custom_call.1} parent=11 // pred_check_branch
          %119 = sbr.rel (%p117) target = $region16
        $region15: #{tpu_custom_call.1} parent=11 // pred_region
          %121 = vsyncadd [#allocation7], 0
          %s122 = sshll.u32 %s3, 4
          %s123 = int_to_ptr.hbm [resolvable:$true] %s122
          %s124 = sshll.u32 [#allocation6], 4
          %s125 = int_to_ptr.vmem [resolvable:$true] %s124
          %130 = dma.hbm_to_vmem [thread:$0]  %s123, 144, %s125, [#allocation7], 48, 48, 3
        $region16: #{tpu_custom_call.1} parent=11 // pred_fallthru
          _
        // Predicated region
        $region17: #{tpu_custom_call.1} parent=11 // pred_check
          %p131 = pneg %p76
        $region18: #{tpu_custom_call.1} parent=11 // pred_check_branch
          %133 = sbr.rel (%p131) target = $region20
        $region19: #{tpu_custom_call.1} parent=11 // pred_region
          %135 = vsyncadd [#allocation10], 0
          %s136 = sshll.u32 %s4, 4
          %s137 = int_to_ptr.hbm [resolvable:$true] %s136
          %s138 = sshll.u32 [#allocation9], 4
          %s139 = int_to_ptr.vmem [resolvable:$true] %s138
          %144 = dma.hbm_to_vmem [thread:$0]  %s137, 144, %s139, [#allocation10], 48, 48, 3
        $region20: #{tpu_custom_call.1} parent=11 // pred_fallthru
          _
      $region12: #{tpu_custom_call.1} parent=5 // pred_fallthru
        _
      %p145 = scmp.lt.s32.totalorder %s34, 3
      // Predicated region
      $region21: #{tpu_custom_call.1} parent=5 // pred_check
        %p146 = pneg %p145
      $region22: #{tpu_custom_call.1} parent=5 // pred_check_branch
        %148 = sbr.rel (%p146) target = $region24
      $region23: #{tpu_custom_call.1} parent=5 // pred_region
        _
      $region24: #{tpu_custom_call.1} parent=5 // pred_fallthru
        _
      %p149 = scmp.le.s32.totalorder 1, %s34
      %p150 = scmp.lt.s32.totalorder %s34, 4
      %p151 = pnand %p149, %p150
      %p152 = pneg %p151
      // Predicated region
      $region25: #{tpu_custom_call.1} parent=5 // pred_check
        _
      $region26: #{tpu_custom_call.1} parent=5 // pred_check_branch
        %154 = sbr.rel (%p151) target = $region28
      $region27: #{tpu_custom_call.1} parent=5 // pred_region
        %s155 = ssub.s32 %s34, 1
        // Predicated region
        $region29: #{tpu_custom_call.1} parent=27 // pred_check
          %p156 = pneg %p55
        $region30: #{tpu_custom_call.1} parent=27 // pred_check_branch
          %158 = sbr.rel (%p156) target = $region32
        $region31: #{tpu_custom_call.1} parent=27 // pred_region
          %160 = dma.done [#allocation7], 144
        $region32: #{tpu_custom_call.1} parent=27 // pred_fallthru
          _
        // Predicated region
        $region33: #{tpu_custom_call.1} parent=27 // pred_check
          %p161 = pneg %p76
        $region34: #{tpu_custom_call.1} parent=27 // pred_check_branch
          %163 = sbr.rel (%p161) target = $region36
        $region35: #{tpu_custom_call.1} parent=27 // pred_region
          %165 = dma.done [#allocation10], 144
        $region36: #{tpu_custom_call.1} parent=27 // pred_fallthru
          _
        %p166 = pneg %p55
        %p167 = pneg %p52
        %p168 = pneg %p76
        %p169 = pneg %p73
        %p170 = pneg %p102
        %p171 = pneg %p99
        %s172 = sand.u32 %s89, 1
        %s173 = scalar_lea.sflag [#allocation8], %s172
        %s174 = sand.u32 %s89, 1
        %s175 = smul.addr %s174, 48
        %s176 = scalar_lea.vmem [#allocation11], %s175
        %s177 = smul.u32 2, %s39
        %s178 = sld [smem:[#allocation3 + %s39]]
        %v179 = vlaneseq
        %v180 = vshrl.u32 %v179, 7
        %v181 = vadd.s32 %v180, 8
        %s182 = sld [smem:[#allocation5 + %s39]]
        %v183 = vstv %s182
        %v184 = vmul.u32 %v180, %v183
        %v185 = vmul.u32 %v181, %v183
        %s186 = sld [smem:[#allocation4 + %s39]]
        %v187 = vstv %s186
        %v188 = vadd.s32 %v184, %v187
        %v189 = vadd.s32 %v185, %v187
        %v190 = vcvt.s32.f32 %v188
        %v191 = vcvt.s32.f32 %v189
        %s192 = smul.u32 %s178, 3
        %s193 = scalar_lea.vmem [#allocation6], %s192
        %v194 = vld [vmem:[%s193] sm:$0x7]
        %s195 = scalar_lea.vmem [#allocation9], %s192
        %v196 = vld [vmem:[%s195] sm:$0x7]
        %v198 = vperm.slane %v196, 0
        %v199 = vperm.slane %v196, 1
        %v200 = vperm.slane %v196, 2
        %v204 = vmul.f32 %v198, %v190
        %v205 = vmul.f32 %v199, %v190
        %v206 = vmul.f32 %v200, %v190
        %v207 = vmul.f32 %v198, %v191
        %v208 = vmul.f32 %v199, %v191
        %v209 = vmul.f32 %v200, %v191
        %v211 = vperm.slane %v194, 0
        %v212 = vperm.slane %v194, 1
        %v213 = vperm.slane %v194, 2
        %v217 = vadd.f32 %v211, %v204
        %v218 = vadd.f32 %v212, %v205
        %v219 = vadd.f32 %v213, %v206
        %v220 = vadd.f32 %v211, %v207
        %v221 = vadd.f32 %v212, %v208
        %v222 = vadd.f32 %v213, %v209
        %223 = vst [vmem:[%s176] sm:$0xff] %v217
        %224 = vst [vmem:[%s176 + $0x8] sm:$0xff] %v218
        %225 = vst [vmem:[%s176 + $0x10] sm:$0xff] %v219
        %226 = vst [vmem:[%s176 + $0x18] sm:$0xff] %v220
        %227 = vst [vmem:[%s176 + $0x20] sm:$0xff] %v221
        %228 = vst [vmem:[%s176 + $0x28] sm:$0xff] %v222
        %s229 = sand.u32 %s89, 1
        %s230 = scalar_lea.sflag [#allocation8], %s229
        %s231 = sand.u32 %s89, 1
        %s232 = smul.addr %s231, 48
        %s233 = scalar_lea.vmem [#allocation11], %s232
        // Predicated region
        $region37: #{tpu_custom_call.1} parent=27 // pred_check
          %p234 = pneg %p99
        $region38: #{tpu_custom_call.1} parent=27 // pred_check_branch
          %236 = sbr.rel (%p234) target = $region40
        $region39: #{tpu_custom_call.1} parent=27 // pred_region
          %s237 = smul.u32 2, %s39
          %239 = vsyncadd %s230, 0
          %s240 = smul.addr %s237, 3
          %s241 = smul.addr %s240, 8
          %s242 = scalar_lea.hbm %s5, %s241
          %s243 = sshll.u32 %s233, 4
          %s244 = int_to_ptr.vmem [resolvable:$true] %s243
          %s245 = sshll.u32 %s242, 4
          %s246 = int_to_ptr.hbm [resolvable:$true] %s245
          %251 = dma.vmem_to_hbm [thread:$0]  %s244, 768, %s246, %s230, 384, 384, 24
        $region40: #{tpu_custom_call.1} parent=27 // pred_fallthru
          _
      $region28: #{tpu_custom_call.1} parent=5 // pred_fallthru
        _
      %p252 = scmp.le.s32.totalorder 2, %s34
      // Predicated region
      $region41: #{tpu_custom_call.1} parent=5 // pred_check
        %p253 = pneg %p252
      $region42: #{tpu_custom_call.1} parent=5 // pred_check_branch
        %255 = sbr.rel (%p253) target = $region44
      $region43: #{tpu_custom_call.1} parent=5 // pred_region
        %s256 = ssub.s32 %s34, 2
        // Predicated region
        $region45: #{tpu_custom_call.1} parent=43 // pred_check
          %p257 = pneg %p105
        $region46: #{tpu_custom_call.1} parent=43 // pred_check_branch
          %259 = sbr.rel (%p257) target = $region48
        $region47: #{tpu_custom_call.1} parent=43 // pred_region
          %s260 = sand.u32 %s90, 1
          %s261 = scalar_lea.sflag [#allocation8], %s260
          %s262 = sand.u32 %s90, 1
          %s263 = smul.addr %s262, 48
          %s264 = scalar_lea.vmem [#allocation11], %s263
          %266 = dma.done %s261, 768
        $region48: #{tpu_custom_call.1} parent=43 // pred_fallthru
          _
      $region44: #{tpu_custom_call.1} parent=5 // pred_fallthru
        _
    $region6: #{tpu_custom_call.1} parent=1 // loop_footer
      %s38 = sadd.s32 1, %s34
    $region7: #{tpu_custom_call.1} parent=1 // loop_footer_branch
      %33 = sbr.rel target = $region3
    $region8: #{tpu_custom_call.1} parent=1 // loop_exit
      _
    %267 = vsyncpa [#allocation7], 1
    %s268 = scalar_lea.sflag [#allocation7], 1
    %269 = vsyncpa %s268, 1
    %270 = vsyncpa [#allocation10], 1
    %271 = vsyncpa [#allocation8], 1
    %s272 = scalar_lea.sflag [#allocation8], 1
    %273 = vsyncpa %s272, 1

</llo_original>
